<compile_context>
chip_gen: v5e
topology: v5e:2x2
jax: 0.10.0
libtpu: 0.0.40
codegen_flags: <defaults>
</compile_context>

<pallas_src>
import functools

import jax
import jax.numpy as jnp
from jax.experimental import pallas as pl
from jax.experimental.pallas import tpu as pltpu


_LANES = 128
_SUBLANES = 8
_MAX_BLOCK_ROWS = 2048   # (2048, 128) f32 block = 1 MiB per input per buffer


def _round_up(x, m):
    return ((x + m - 1) // m) * m


def _bpr_loss_kernel(pos_ref, neg_ref, out_ref, acc_ref, *, n, gamma, block_rows):
    i = pl.program_id(0)
    nsteps = pl.num_programs(0)

    @pl.when(i == 0)
    def _init():
        acc_ref[0, 0] = jnp.float32(0.0)

    diff = pos_ref[...].astype(jnp.float32) - neg_ref[...].astype(jnp.float32)

    # -log(gamma + sigmoid(diff))
    #   = -log(gamma + 1/(1+e))              with e = exp(-diff)
    #   =  log(1+e) - log(1 + gamma*(1+e))
    # Mathematically exact (keeps the gamma floor), overflow-safe via the clamp
    # (past z = 80 the gamma term dominates and the value saturates at
    # -log(gamma)), and avoids the multi-op full-precision divide.
    z = jnp.minimum(-diff, 80.0)
    e = jnp.exp(z)
    one_plus_e = 1.0 + e
    vals = jnp.log(one_plus_e) - jnp.log(1.0 + jnp.float32(gamma) * one_plus_e)

    # Only tiles that reach past the true length N need the mask (the zero
    # padding added by the wrapper lives entirely inside those tiles).
    tile_reaches_pad = (i + 1) * block_rows > (n // _LANES)

    @pl.when(jnp.logical_not(tile_reaches_pad))
    def _accum_full():
        acc_ref[0, 0] += jnp.sum(vals)

    @pl.when(tile_reaches_pad)
    def _accum_masked():
        row = jax.lax.broadcasted_iota(jnp.int32, vals.shape, 0)
        lane = jax.lax.broadcasted_iota(jnp.int32, vals.shape, 1)
        gidx = (i * block_rows + row) * _LANES + lane   # global element index
        acc_ref[0, 0] += jnp.sum(jnp.where(gidx < n, vals, 0.0))

    @pl.when(i == nsteps - 1)
    def _finalize():
        out_ref[0, 0] = acc_ref[0, 0] / jnp.float32(n)


def bpr_loss(pos_score, neg_score, gamma=1e-10, *,
             max_block_rows=_MAX_BLOCK_ROWS, min_kernel_size=1024):
    """BPR loss: -mean(log(gamma + sigmoid(pos_score - neg_score)))."""
    assert pos_score.shape == neg_score.shape
    assert pos_score.ndim == 1
    n = pos_score.shape[0]

    if n < min_kernel_size:
        # pallas_call fixed overhead dwarfs ~1k elementwise ops; use plain XLA.
        diff = pos_score.astype(jnp.float32) - neg_score.astype(jnp.float32)
        return -jnp.mean(jnp.log(gamma + jax.nn.sigmoid(diff)))

    # Sublane-packed layout: rows of 128 lanes, row count a multiple of 8.
    rows = _round_up(pl.cdiv(n, _LANES), _SUBLANES)
    # Balance the blocks so the grid divides `rows` exactly (no out-of-bounds
    # tiles) while keeping per-input blocks <= ~1 MiB.
    num_blocks = pl.cdiv(rows, max(int(max_block_rows), _SUBLANES))
    block_rows = _round_up(pl.cdiv(rows, num_blocks), _SUBLANES)
    rows = num_blocks * block_rows
    n_pad = rows * _LANES

    def prep(x):
        if n_pad != n:                 # single jnp.pad copy, only when needed
            x = jnp.pad(x, (0, n_pad - n))
        return x.reshape(rows, _LANES)

    kernel = functools.partial(
        _bpr_loss_kernel, n=n, gamma=float(gamma), block_rows=block_rows)

    out = pl.pallas_call(
        kernel,
        out_shape=jax.ShapeDtypeStruct((1, 1), jnp.float32),
        grid=(num_blocks,),
        in_specs=[
            pl.BlockSpec((block_rows, _LANES), lambda i: (i, 0)),
            pl.BlockSpec((block_rows, _LANES), lambda i: (i, 0)),
        ],
        out_specs=pl.BlockSpec(memory_space=pltpu.MemorySpace.SMEM),
        scratch_shapes=[pltpu.SMEM((1, 1), jnp.float32)],
        compiler_params=pltpu.CompilerParams(
            dimension_semantics=("arbitrary",)),
    )(prep(pos_score), prep(neg_score))
    return out[0, 0]


def bpr_loss_ref(pos_score, neg_score, gamma=1e-10):
    # Pure-JAX reference mirroring the PyTorch forward.
    diff = pos_score.astype(jnp.float32) - neg_score.astype(jnp.float32)
    return -jnp.mean(jnp.log(gamma + jax.nn.sigmoid(diff)))


if __name__ == "__main__":
    key = jax.random.PRNGKey(0)
    k_pos, k_neg = jax.random.split(key)

    def check(n, **kwargs):
        pos = jax.random.normal(k_pos, (n,), dtype=jnp.float32)
        neg = jax.random.normal(k_neg, (n,), dtype=jnp.float32)
        got = jax.block_until_ready(bpr_loss(pos, neg, **kwargs))
        want = bpr_loss_ref(pos, neg)
        assert jnp.allclose(got, want, rtol=1e-5, atol=1e-5), (n, got, want)

    # Multi-tile Pallas path: grid of 3 (block_rows=16); N is not a multiple
    # of 1024, exercising the padded tail + last-tile mask.
    check(6000, max_block_rows=16)
    # Single-tile Pallas path with the default block size; N already aligned,
    # so no padding copy is made at all.
    check(4096)
    # Tiny-N fast path (pure-JAX fallback; kernel overhead not worth it).
    check(200)

    print("KERNEL_OK")
</pallas_src>

<mosaic_0001>
module attributes {stable_mosaic.version = 11 : i64} {
  func.func @_bpr_loss_kernel(%arg0: i32, %arg1: memref<16x128xf32, #tpu.memory_space<vmem>>, %arg2: memref<16x128xf32, #tpu.memory_space<vmem>>, %arg3: memref<1x1xf32, #tpu.memory_space<smem>>, %arg4: memref<1x1xf32, #tpu.memory_space<smem>>) attributes {dimension_semantics = [#tpu.dimension_semantics<arbitrary>], iteration_bounds = array<i64: 3>, scalar_prefetch = 0 : i64, scratch_operands = 1 : i64, tpu.core_type = #tpu.core_type<tc>, window_params = [{transform_indices = @transform_0, window_bounds = array<i64: 16, 128>}, {transform_indices = @transform_1, window_bounds = array<i64: 16, 128>}, {transform_indices = @transform_2, window_bounds = array<i64: 1, 1>}]} {
    %c0_i32 = arith.constant 0 : i32
    %0 = arith.cmpi eq, %arg0, %c0_i32 : i32
    %1 = arith.extui %0 : i1 to i32
    %c0_i32_0 = arith.constant 0 : i32
    %2 = arith.cmpi ne, %1, %c0_i32_0 : i32
    scf.if %2 {
      %cst_11 = arith.constant 0.000000e+00 : f32
      %c0_12 = arith.constant 0 : index
      %c0_13 = arith.constant 0 : index
      %31 = memref.load %arg4[%c0_12, %c0_13] : memref<1x1xf32, #tpu.memory_space<smem>>
      memref.store %cst_11, %arg4[%c0_12, %c0_13] : memref<1x1xf32, #tpu.memory_space<smem>>
    } else {
    }
    %c0 = arith.constant 0 : index
    %c0_1 = arith.constant 0 : index
    %3 = vector.load %arg1[%c0, %c0_1] : memref<16x128xf32, #tpu.memory_space<vmem>>, vector<16x128xf32>
    %c0_2 = arith.constant 0 : index
    %c0_3 = arith.constant 0 : index
    %4 = vector.load %arg2[%c0_2, %c0_3] : memref<16x128xf32, #tpu.memory_space<vmem>>, vector<16x128xf32>
    %5 = arith.subf %3, %4 : vector<16x128xf32>
    %cst = arith.constant 0.000000e+00 : f32
    %6 = vector.broadcast %cst : f32 to vector<16x128xf32>
    %7 = arith.subf %6, %5 : vector<16x128xf32>
    %cst_4 = arith.constant 8.000000e+01 : f32
    %8 = vector.broadcast %cst_4 : f32 to vector<16x128xf32>
    %9 = arith.minimumf %7, %8 : vector<16x128xf32>
    %10 = math.exp %9 : vector<16x128xf32>
    %cst_5 = arith.constant 1.000000e+00 : f32
    %11 = vector.broadcast %cst_5 : f32 to vector<16x128xf32>
    %12 = arith.addf %11, %10 : vector<16x128xf32>
    %13 = math.log %12 : vector<16x128xf32>
    %cst_6 = arith.constant 1.000000e-10 : f32
    %14 = vector.broadcast %cst_6 : f32 to vector<16x128xf32>
    %15 = arith.mulf %14, %12 : vector<16x128xf32>
    %cst_7 = arith.constant 1.000000e+00 : f32
    %16 = vector.broadcast %cst_7 : f32 to vector<16x128xf32>
    %17 = arith.addf %16, %15 : vector<16x128xf32>
    %18 = math.log %17 : vector<16x128xf32>
    %19 = arith.subf %13, %18 : vector<16x128xf32>
    %c1_i32 = arith.constant 1 : i32
    %20 = arith.addi %arg0, %c1_i32 : i32
    %c16_i32 = arith.constant 16 : i32
    %21 = arith.muli %20, %c16_i32 : i32
    %c46_i32 = arith.constant 46 : i32
    %22 = arith.cmpi sgt, %21, %c46_i32 : i32
    %true = arith.constant true
    %23 = arith.xori %22, %true : i1
    %24 = arith.extui %23 : i1 to i32
    %c0_i32_8 = arith.constant 0 : i32
    %25 = arith.cmpi ne, %24, %c0_i32_8 : i32
    scf.if %25 {
      %c0_11 = arith.constant 0 : index
      %c0_12 = arith.constant 0 : index
      %31 = memref.load %arg4[%c0_11, %c0_12] : memref<1x1xf32, #tpu.memory_space<smem>>
      %32 = vector.shape_cast %19 : vector<16x128xf32> to vector<1x16x128xf32>
      %cst_13 = arith.constant dense<0.000000e+00> : vector<1xf32>
      %33 = vector.multi_reduction <add>, %32, %cst_13 [1, 2] : vector<1x16x128xf32> to vector<1xf32>
      %34 = vector.shape_cast %33 : vector<1xf32> to vector<1x1x1xf32>
      %35 = vector.extract %34[0, 0, 0] : f32 from vector<1x1x1xf32>
      %36 = arith.addf %31, %35 : f32
      %c0_14 = arith.constant 0 : index
      %c0_15 = arith.constant 0 : index
      %37 = memref.load %arg4[%c0_14, %c0_15] : memref<1x1xf32, #tpu.memory_space<smem>>
      memref.store %36, %arg4[%c0_14, %c0_15] : memref<1x1xf32, #tpu.memory_space<smem>>
    } else {
    }
    %26 = arith.extui %22 : i1 to i32
    %c0_i32_9 = arith.constant 0 : i32
    %27 = arith.cmpi ne, %26, %c0_i32_9 : i32
    scf.if %27 {
      %31 = tpu.iota {dimensions = array<i32: 0>} : vector<16x128xi32>
      %32 = tpu.iota {dimensions = array<i32: 1>} : vector<16x128xi32>
      %c16_i32_11 = arith.constant 16 : i32
      %33 = arith.muli %arg0, %c16_i32_11 : i32
      %34 = vector.broadcast %33 : i32 to vector<16x128xi32>
      %35 = arith.addi %34, %31 : vector<16x128xi32>
      %c128_i32 = arith.constant 128 : i32
      %36 = vector.broadcast %c128_i32 : i32 to vector<16x128xi32>
      %37 = arith.muli %35, %36 : vector<16x128xi32>
      %38 = arith.addi %37, %32 : vector<16x128xi32>
      %c0_12 = arith.constant 0 : index
      %c0_13 = arith.constant 0 : index
      %39 = memref.load %arg4[%c0_12, %c0_13] : memref<1x1xf32, #tpu.memory_space<smem>>
      %c6000_i32 = arith.constant 6000 : i32
      %40 = vector.broadcast %c6000_i32 : i32 to vector<16x128xi32>
      %41 = arith.cmpi slt, %38, %40 : vector<16x128xi32>
      %cst_14 = arith.constant 0.000000e+00 : f32
      %42 = vector.broadcast %cst_14 : f32 to vector<16x128xf32>
      %43 = arith.select %41, %19, %42 : vector<16x128xi1>, vector<16x128xf32>
      %44 = vector.shape_cast %43 : vector<16x128xf32> to vector<1x16x128xf32>
      %cst_15 = arith.constant dense<0.000000e+00> : vector<1xf32>
      %45 = vector.multi_reduction <add>, %44, %cst_15 [1, 2] : vector<1x16x128xf32> to vector<1xf32>
      %46 = vector.shape_cast %45 : vector<1xf32> to vector<1x1x1xf32>
      %47 = vector.extract %46[0, 0, 0] : f32 from vector<1x1x1xf32>
      %48 = arith.addf %39, %47 : f32
      %c0_16 = arith.constant 0 : index
      %c0_17 = arith.constant 0 : index
      %49 = memref.load %arg4[%c0_16, %c0_17] : memref<1x1xf32, #tpu.memory_space<smem>>
      memref.store %48, %arg4[%c0_16, %c0_17] : memref<1x1xf32, #tpu.memory_space<smem>>
    } else {
    }
    %c2_i32 = arith.constant 2 : i32
    %28 = arith.cmpi eq, %arg0, %c2_i32 : i32
    %29 = arith.extui %28 : i1 to i32
    %c0_i32_10 = arith.constant 0 : i32
    %30 = arith.cmpi ne, %29, %c0_i32_10 : i32
    scf.if %30 {
      %c0_11 = arith.constant 0 : index
      %c0_12 = arith.constant 0 : index
      %31 = memref.load %arg4[%c0_11, %c0_12] : memref<1x1xf32, #tpu.memory_space<smem>>
      %cst_13 = arith.constant 6.000000e+03 : f32
      %32 = arith.divf %31, %cst_13 : f32
      %c0_14 = arith.constant 0 : index
      %c0_15 = arith.constant 0 : index
      %33 = memref.load %arg3[%c0_14, %c0_15] : memref<1x1xf32, #tpu.memory_space<smem>>
      memref.store %32, %arg3[%c0_14, %c0_15] : memref<1x1xf32, #tpu.memory_space<smem>>
    } else {
    }
    return
  }
  func.func @transform_0(%arg0: i32) -> (i32, i32) {
    %c0_i32 = arith.constant 0 : i32
    %c0_i32_0 = arith.constant 0 : i32
    return %arg0, %c0_i32 : i32, i32
  }
  func.func @transform_1(%arg0: i32) -> (i32, i32) {
    %c0_i32 = arith.constant 0 : i32
    %c0_i32_0 = arith.constant 0 : i32
    return %arg0, %c0_i32 : i32, i32
  }
  func.func @transform_2(%arg0: i32) -> (i32, i32) {
    %c0_i32 = arith.constant 0 : i32
    %c0_i32_0 = arith.constant 0 : i32
    %c0_i32_1 = arith.constant 0 : i32
    return %c0_i32, %c0_i32_0 : i32, i32
  }
}

</mosaic_0001>

<llo_original>
// kernel: tpu_custom_call.1
$region0: #{tpu_custom_call.1}
  #allocation0 [shape = 'u32[]', space=smem, size = 0x4, offset = 0x4, fixed_abs, tag = 'smem constant byte address 0x4 - core index']
  #allocation1 [shape = 'u32[72,128]{1,0:T(1,128)}', space=vmem, size = 0x9000, scoped, tag = 'internal scratch']
  #allocation2 [shape = 'f32[1,1]{1,0:T(1,128)}', space=smem, size = 0x200, scoped, tag = 'scratch operand']
  %s0 = inlined_call_operand.hbm [shape: f32[48,128], index: 0, kind: input, shape index: {}]
  %s1 = inlined_call_operand.hbm [shape: f32[48,128], index: 1, kind: input, shape index: {}]
  %s2 = inlined_call_operand.hbm [shape: f32[1,1], index: 2, kind: output, shape index: {}]
  %s3 = sld [smem:[#allocation0]]
  $region65: #{tpu_custom_call.1} parent=0
    _
  %s5 = ssub.s32 1, %s3
  %s6 = scalar_select 0, %s5, %s3
  $region1: #{tpu_custom_call.1} parent=0
    #allocation3 [shape = 'u8[16384]{0}', space=vmem, size = 0x4000, scoped, tag = 'input window, operand 0']
    #allocation4 [shape = 's32[2]{0}', space=sflag, size = 0x8, scoped, tag = 'scoped memory for tpu_custom_call.1']
    #allocation5 [shape = 's32[2]{0}', space=sflag, size = 0x8, scoped, tag = 'scoped memory for tpu_custom_call.1']
    #allocation6 [shape = 'u8[16384]{0}', space=vmem, size = 0x4000, scoped, tag = 'input window, operand 1']
    #allocation7 [shape = 's32[2]{0}', space=sflag, size = 0x8, scoped, tag = 'scoped memory for tpu_custom_call.1']
    #allocation8 [shape = 'u8[512]{0}', space=smem, size = 0x200, scoped, tag = 'output window, operand 0, single buffered']
    %7 = vsyncpa [#allocation4], 0
    %s8 = scalar_lea.sflag [#allocation4], 1
    %9 = vsyncpa %s8, 0
    %10 = vsyncpa [#allocation7], 0
    %s11 = scalar_lea.sflag [#allocation7], 1
    %12 = vsyncpa %s11, 0
    %13 = vsyncpa [#allocation5], 0
    loop: start=0, step=1, limit=5
    $region2: #{tpu_custom_call.1} parent=1 // loop_pre_header
      _
    $region3: #{tpu_custom_call.1} parent=1 // loop_header
      %s15 = sphi 0, %s19
      %p16 = scmp.ge.s32.totalorder %s15, 5
      %s25 = sphi 0, %s27
      %s28 = sphi 0, %s25
      %s29 = sphi 0, %s28
      %s45 = sphi 0, %s29
      %s51 = sphi 0, %s53
      %s54 = sphi 0, %s51
      %s55 = sphi 0, %s54
      %s71 = sphi 0, %s55
      %s75 = sphi 0, %s75
      %s77 = sphi 0, %s75
      %s78 = sphi 0, %s77
      %s92 = sphi 0, %s78
    $region4: #{tpu_custom_call.1} parent=1 // loop_header_branch
      %18 = sbr.rel (%p16) target = $region8
    $region5: #{tpu_custom_call.1} parent=1 // loop_body
      %s20 = ssub.s32 %s15, 1
      %s21 = ssub.s32 %s15, 2
      %s22 = sadd.s32 %s15, 1
      %s23 = ssub.s32 %s15, %s22
      %p24 = scmp.eq.s32.totalorder %s23, 0
      %s26 = sadd.s32 %s25, 1
      %s27 = scalar_select %p24, %s25, %s26
      %p30 = pneg %p24
      %p31 = scmp.eq.s32.totalorder %s15, 2
      %p32 = por %p30, %p31
      %p33 = scmp.ne.s32.totalorder %s25, %s28
      %p34 = scmp.eq.s32.totalorder %s15, 0
      %p35 = por %p33, %p34
      %p36 = scmp.ne.s32.totalorder %s25, %s28
      %p37 = scmp.eq.s32.totalorder %s20, 2
      %p38 = por %p36, %p37
      %p39 = scmp.ne.s32.totalorder %s28, %s29
      %p40 = scmp.eq.s32.totalorder %s20, 0
      %p41 = por %p39, %p40
      %p42 = scmp.ne.s32.totalorder %s28, %s29
      %p43 = scmp.eq.s32.totalorder %s21, 2
      %p44 = por %p42, %p43
      %p46 = scmp.ne.s32.totalorder %s29, %s45
      %p47 = scmp.eq.s32.totalorder %s21, 0
      %p48 = por %p46, %p47
      %s49 = ssub.s32 %s15, %s22
      %p50 = scmp.eq.s32.totalorder %s49, 0
      %s52 = sadd.s32 %s51, 1
      %s53 = scalar_select %p50, %s51, %s52
      %p56 = pneg %p50
      %p57 = scmp.eq.s32.totalorder %s15, 2
      %p58 = por %p56, %p57
      %p59 = scmp.ne.s32.totalorder %s51, %s54
      %p60 = scmp.eq.s32.totalorder %s15, 0
      %p61 = por %p59, %p60
      %p62 = scmp.ne.s32.totalorder %s51, %s54
      %p63 = scmp.eq.s32.totalorder %s20, 2
      %p64 = por %p62, %p63
      %p65 = scmp.ne.s32.totalorder %s54, %s55
      %p66 = scmp.eq.s32.totalorder %s20, 0
      %p67 = por %p65, %p66
      %p68 = scmp.ne.s32.totalorder %s54, %s55
      %p69 = scmp.eq.s32.totalorder %s21, 2
      %p70 = por %p68, %p69
      %p72 = scmp.ne.s32.totalorder %s55, %s71
      %p73 = scmp.eq.s32.totalorder %s21, 0
      %p74 = por %p72, %p73
      %s76 = sadd.s32 %s75, 1
      %p79 = scmp.eq.s32.totalorder %s15, 2
      %p80 = scmp.ne.s32.totalorder %s75, %s77
      %p81 = scmp.eq.s32.totalorder %s15, 0
      %p82 = por %p80, %p81
      %p83 = scmp.ne.s32.totalorder %s75, %s77
      %p84 = scmp.eq.s32.totalorder %s20, 2
      %p85 = por %p83, %p84
      %p86 = scmp.ne.s32.totalorder %s77, %s78
      %p87 = scmp.eq.s32.totalorder %s20, 0
      %p88 = por %p86, %p87
      %p89 = scmp.ne.s32.totalorder %s77, %s78
      %p90 = scmp.eq.s32.totalorder %s21, 2
      %p91 = por %p89, %p90
      %p93 = scmp.ne.s32.totalorder %s78, %s92
      %p94 = scmp.eq.s32.totalorder %s21, 0
      %p95 = por %p93, %p94
      %p96 = scmp.le.s32.totalorder 1, %s15
      %p97 = scmp.lt.s32.totalorder %s15, 4
      %p98 = pnand %p96, %p97
      %p99 = pneg %p98
      // Predicated region
      $region9: #{tpu_custom_call.1} parent=5 // pred_check
        _
      $region10: #{tpu_custom_call.1} parent=5 // pred_check_branch
        %101 = sbr.rel (%p98) target = $region12
      $region11: #{tpu_custom_call.1} parent=5 // pred_region
        %s102 = ssub.s32 %s15, 1
      $region12: #{tpu_custom_call.1} parent=5 // pred_fallthru
        _
      %p103 = scmp.lt.s32.totalorder %s15, 3
      // Predicated region
      $region13: #{tpu_custom_call.1} parent=5 // pred_check
        %p104 = pneg %p103
      $region14: #{tpu_custom_call.1} parent=5 // pred_check_branch
        %106 = sbr.rel (%p104) target = $region16
      $region15: #{tpu_custom_call.1} parent=5 // pred_region
        // Predicated region
        $region17: #{tpu_custom_call.1} parent=15 // pred_check
          %p107 = pneg %p35
        $region18: #{tpu_custom_call.1} parent=15 // pred_check_branch
          %109 = sbr.rel (%p107) target = $region20
        $region19: #{tpu_custom_call.1} parent=15 // pred_region
          %s110 = sand.u32 %s25, 1
          %s111 = scalar_lea.sflag [#allocation4], %s110
          %s112 = sand.u32 %s25, 1
          %s113 = smul.addr %s112, 16
          %s114 = scalar_lea.vmem [#allocation3], %s113
          %s115 = smul.u32 2, %s15
          %117 = vsyncadd %s111, 0
          %s118 = smul.addr %s115, 8
          %s119 = scalar_lea.hbm %s0, %s118
          %s120 = sshll.u32 %s119, 4
          %s121 = int_to_ptr.hbm [resolvable:$true] %s120
          %s122 = sshll.u32 %s114, 4
          %s123 = int_to_ptr.vmem [resolvable:$true] %s122
          %128 = dma.hbm_to_vmem [thread:$0]  %s121, 256, %s123, %s111, 128, 128, 8
        $region20: #{tpu_custom_call.1} parent=15 // pred_fallthru
          _
        // Predicated region
        $region21: #{tpu_custom_call.1} parent=15 // pred_check
          %p129 = pneg %p61
        $region22: #{tpu_custom_call.1} parent=15 // pred_check_branch
          %131 = sbr.rel (%p129) target = $region24
        $region23: #{tpu_custom_call.1} parent=15 // pred_region
          %s132 = sand.u32 %s51, 1
          %s133 = scalar_lea.sflag [#allocation7], %s132
          %s134 = sand.u32 %s51, 1
          %s135 = smul.addr %s134, 16
          %s136 = scalar_lea.vmem [#allocation6], %s135
          %s137 = smul.u32 2, %s15
          %139 = vsyncadd %s133, 0
          %s140 = smul.addr %s137, 8
          %s141 = scalar_lea.hbm %s1, %s140
          %s142 = sshll.u32 %s141, 4
          %s143 = int_to_ptr.hbm [resolvable:$true] %s142
          %s144 = sshll.u32 %s136, 4
          %s145 = int_to_ptr.vmem [resolvable:$true] %s144
          %150 = dma.hbm_to_vmem [thread:$0]  %s143, 256, %s145, %s133, 128, 128, 8
        $region24: #{tpu_custom_call.1} parent=15 // pred_fallthru
          _
      $region16: #{tpu_custom_call.1} parent=5 // pred_fallthru
        _
      %p151 = scmp.le.s32.totalorder 1, %s15
      %p152 = scmp.lt.s32.totalorder %s15, 4
      %p153 = pnand %p151, %p152
      %p154 = pneg %p153
      // Predicated region
      $region25: #{tpu_custom_call.1} parent=5 // pred_check
        _
      $region26: #{tpu_custom_call.1} parent=5 // pred_check_branch
        %156 = sbr.rel (%p153) target = $region28
      $region27: #{tpu_custom_call.1} parent=5 // pred_region
        %s157 = ssub.s32 %s15, 1
        %s158 = sand.u32 %s28, 1
        %s159 = scalar_lea.sflag [#allocation4], %s158
        %s160 = sand.u32 %s28, 1
        %s161 = smul.addr %s160, 16
        %s162 = scalar_lea.vmem [#allocation3], %s161
        // Predicated region
        $region29: #{tpu_custom_call.1} parent=27 // pred_check
          %p163 = pneg %p41
        $region30: #{tpu_custom_call.1} parent=27 // pred_check_branch
          %165 = sbr.rel (%p163) target = $region32
        $region31: #{tpu_custom_call.1} parent=27 // pred_region
          %167 = dma.done %s159, 256
        $region32: #{tpu_custom_call.1} parent=27 // pred_fallthru
          _
        %s168 = sand.u32 %s54, 1
        %s169 = scalar_lea.sflag [#allocation7], %s168
        %s170 = sand.u32 %s54, 1
        %s171 = smul.addr %s170, 16
        %s172 = scalar_lea.vmem [#allocation6], %s171
        // Predicated region
        $region33: #{tpu_custom_call.1} parent=27 // pred_check
          %p173 = pneg %p67
        $region34: #{tpu_custom_call.1} parent=27 // pred_check_branch
          %175 = sbr.rel (%p173) target = $region36
        $region35: #{tpu_custom_call.1} parent=27 // pred_region
          %177 = dma.done %s169, 256
        $region36: #{tpu_custom_call.1} parent=27 // pred_fallthru
          _
        %s178 = sand.u32 %s28, 1
        %s179 = scalar_lea.sflag [#allocation4], %s178
        %s180 = sand.u32 %s28, 1
        %s181 = smul.addr %s180, 16
        %s182 = scalar_lea.vmem [#allocation3], %s181
        %p183 = pneg %p41
        %p184 = pneg %p38
        %s185 = sand.u32 %s54, 1
        %s186 = scalar_lea.sflag [#allocation7], %s185
        %s187 = sand.u32 %s54, 1
        %s188 = smul.addr %s187, 16
        %s189 = scalar_lea.vmem [#allocation6], %s188
        %p190 = pneg %p67
        %p191 = pneg %p64
        %p192 = pneg %p88
        %p193 = pneg %p85
        %s194 = smul.u32 2, %s20
        %s195 = smul.u32 2, %s20
        %p196 = scmp.eq.s32.totalorder %s20, 0
        // Predicated region
        $region37: #{tpu_custom_call.1} parent=27 // pred_check
          %p197 = pneg %p196
        $region38: #{tpu_custom_call.1} parent=27 // pred_check_branch
          %199 = sbr.rel (%p197) target = $region40
        $region39: #{tpu_custom_call.1} parent=27 // pred_region
          %s200 = scalar_lea.smem [#allocation2], 0
          %201 = sst [smem:[%s200]] 0.0
        $region40: #{tpu_custom_call.1} parent=27 // pred_fallthru
          _
        %v202 = vld [vmem:[%s162] sm:$0xff]
        %v203 = vld [vmem:[%s162 + $0x8] sm:$0xff]
        %v204 = vld [vmem:[%s172] sm:$0xff]
        %v205 = vld [vmem:[%s172 + $0x8] sm:$0xff]
        %v206 = vsub.f32 %v202, %v204
        %v207 = vsub.f32 %v203, %v205
        %v208 = vsub.f32 0.0, %v206
        %v209 = vsub.f32 0.0, %v207
        %v210 = vmin.f32 %v208, 80.0
        %v211 = vmin.f32 %v209, 80.0
        %v212 = vmul.f32 %v210, 1.442695
        %v213 = vpow.pop %v212
        %v214 = vmul.f32 %v211, 1.442695
        %v215 = vpow.pop %v214
        %v216 = vadd.f32 %v213, 1.0
        %v217 = vadd.f32 %v215, 1.0
        %v218 = vlog2.pop %v216
        %v219 = vmul.f32 %v218, 0.6931472
        %v220 = vlog2.pop %v217
        %v221 = vmul.f32 %v220, 0.6931472
        %v222 = vmul.f32 %v216, 1e-10
        %v223 = vmul.f32 %v217, 1e-10
        %v224 = vadd.f32 %v222, 1.0
        %v225 = vadd.f32 %v223, 1.0
        %v226 = vlog2.pop %v224
        %v227 = vmul.f32 %v226, 0.6931472
        %v228 = vlog2.pop %v225
        %v229 = vmul.f32 %v228, 0.6931472
        %v230 = vsub.f32 %v219, %v227
        %v231 = vsub.f32 %v221, %v229
        %s232 = sadd.s32 %s20, 1
        %s233 = smul.u32 %s232, 16
        %p234 = scmp.gt.s32.totalorder %s233, 46
        %p235 = scmp.le.s32.totalorder %s233, 46
        // Predicated region
        $region41: #{tpu_custom_call.1} parent=27 // pred_check
          %p236 = pneg %p235
        $region42: #{tpu_custom_call.1} parent=27 // pred_check_branch
          %238 = sbr.rel (%p236) target = $region44
        $region43: #{tpu_custom_call.1} parent=27 // pred_region
          %s239 = sld [smem:[#allocation2]]
          %v240 = vadd.f32 %v230, %v231
          %241 = vadd.xlane.f32.xlu0 %v240
          %v242 = vpop.xlane.xlu0 %241
          %v243 = vrot.slane %v242, 4
          %v244 = vadd.f32 %v242, %v243
          %v245 = vrot.slane %v244, 2
          %v246 = vadd.f32 %v244, %v245
          %v247 = vrot.slane %v246, 1
          %v248 = vadd.f32 %v246, %v247
          %s249 = vtos %v248
          %s250 = sadd.f32 %s239, %s249
          %s251 = scalar_lea.smem [#allocation2], 0
          %252 = sst [smem:[%s251]] %s250
        $region44: #{tpu_custom_call.1} parent=27 // pred_fallthru
          _
        // Predicated region
        $region45: #{tpu_custom_call.1} parent=27 // pred_check
          %p253 = pneg %p234
        $region46: #{tpu_custom_call.1} parent=27 // pred_check_branch
          %255 = sbr.rel (%p253) target = $region48
        $region47: #{tpu_custom_call.1} parent=27 // pred_region
          %v256 = vlaneseq
          %v257 = vshrl.u32 %v256, 7
          %v258 = vadd.s32 %v257, 8
          %v259 = vlaneseq
          %v260 = vand.u32 %v259, 127
          %s261 = smul.u32 %s20, 16
          %v262 = vstv %s261
          %v263 = vadd.s32 %v262, %v257
          %v264 = vadd.s32 %v262, %v258
          %v265 = vmul.u32 %v263, 128
          %v266 = vmul.u32 %v264, 128
          %v267 = vadd.s32 %v265, %v260
          %v268 = vadd.s32 %v266, %v260
          %s269 = sld [smem:[#allocation2]]
          %vm270 = vcmp.lt.s32.totalorder %v267, 6000
          %vm271 = vcmp.lt.s32.totalorder %v268, 6000
          %v272 = vsel %vm270, %v230, 0.0
          %v273 = vsel %vm271, %v231, 0.0
          %v274 = vadd.f32 %v272, %v273
          %275 = vadd.xlane.f32.xlu0 %v274
          %v276 = vpop.xlane.xlu0 %275
          %v277 = vrot.slane %v276, 4
          %v278 = vadd.f32 %v276, %v277
          %v279 = vrot.slane %v278, 2
          %v280 = vadd.f32 %v278, %v279
          %v281 = vrot.slane %v280, 1
          %v282 = vadd.f32 %v280, %v281
          %s283 = vtos %v282
          %s284 = sadd.f32 %s269, %s283
          %s285 = scalar_lea.smem [#allocation2], 0
          %286 = sst [smem:[%s285]] %s284
        $region48: #{tpu_custom_call.1} parent=27 // pred_fallthru
          _
        %p287 = scmp.eq.s32.totalorder %s20, 2
        // Predicated region
        $region49: #{tpu_custom_call.1} parent=27 // pred_check
          %p288 = pneg %p287
        $region50: #{tpu_custom_call.1} parent=27 // pred_check_branch
          %290 = sbr.rel (%p288) target = $region52
        $region51: #{tpu_custom_call.1} parent=27 // pred_region
          %s291 = sld [smem:[#allocation2]]
          %v292 = vrcp.pop 6000.0
          %v293 = vmul.f32 6000.0, %v292
          %v294 = vsub.f32 1.0, %v293
          %v295 = vmul.f32 %v292, %v294
          %v296 = vadd.f32 %v292, %v295
          %vm297 = vweird.f32 %v292
          %v298 = vsel %vm297, %v292, %v296
          %s299 = vtos %v298
          %s300 = smul.f32 %s291, %s299
          %s301 = scalar_lea.smem [#allocation8], 0
          %302 = sst [smem:[%s301]] %s300
        $region52: #{tpu_custom_call.1} parent=27 // pred_fallthru
          _
        // Predicated region
        $region53: #{tpu_custom_call.1} parent=27 // pred_check
          %p303 = pneg %p85
        $region54: #{tpu_custom_call.1} parent=27 // pred_check_branch
          %305 = sbr.rel (%p303) target = $region56
        $region55: #{tpu_custom_call.1} parent=27 // pred_region
          %307 = vsyncadd [#allocation5], 0
          %s309 = sshll.u32 %s2, 4
          %s310 = int_to_ptr.hbm [resolvable:$true] %s309
          %312 = dma.smem_to_hbm [#allocation8], 16, %s310, [#allocation5]
        $region56: #{tpu_custom_call.1} parent=27 // pred_fallthru
          _
        // Predicated region
        $region57: #{tpu_custom_call.1} parent=27 // pred_check
          %p313 = pneg %p85
        $region58: #{tpu_custom_call.1} parent=27 // pred_check_branch
          %315 = sbr.rel (%p313) target = $region60
        $region59: #{tpu_custom_call.1} parent=27 // pred_region
          %317 = dma.done [#allocation5], 16
        $region60: #{tpu_custom_call.1} parent=27 // pred_fallthru
          _
        %318 = sfence
      $region28: #{tpu_custom_call.1} parent=5 // pred_fallthru
        _
      %p319 = scmp.le.s32.totalorder 2, %s15
      // Predicated region
      $region61: #{tpu_custom_call.1} parent=5 // pred_check
        %p320 = pneg %p319
      $region62: #{tpu_custom_call.1} parent=5 // pred_check_branch
        %322 = sbr.rel (%p320) target = $region64
      $region63: #{tpu_custom_call.1} parent=5 // pred_region
        %s323 = ssub.s32 %s15, 2
      $region64: #{tpu_custom_call.1} parent=5 // pred_fallthru
        _
    $region6: #{tpu_custom_call.1} parent=1 // loop_footer
      %s19 = sadd.s32 1, %s15
    $region7: #{tpu_custom_call.1} parent=1 // loop_footer_branch
      %14 = sbr.rel target = $region3
    $region8: #{tpu_custom_call.1} parent=1 // loop_exit
      _
    %324 = vsyncpa [#allocation4], 1
    %s325 = scalar_lea.sflag [#allocation4], 1
    %326 = vsyncpa %s325, 1
    %327 = vsyncpa [#allocation7], 1
    %s328 = scalar_lea.sflag [#allocation7], 1
    %329 = vsyncpa %s328, 1
    %330 = vsyncpa [#allocation5], 1
    %s331 = scalar_lea.sflag [#allocation5], 1
    %332 = vsyncpa %s331, 1

</llo_original>
